<compile_context>
chip_gen: v7x
topology: tpu7x:2x2x1
jax: 0.10.0
libtpu: 0.0.40
codegen_flags: <defaults>
</compile_context>

<pallas_src>
import jax
import jax.numpy as jnp
from jax.experimental import pallas as pl
from jax.experimental.pallas import tpu as pltpu

IN_FEATURES = 300
OUT_FEATURES = 128


def _linear_kernel(x_ref, wt_ref, b_ref, o_ref):
    # x_ref : (tm, 300)  tile of the flattened input
    # wt_ref: (300, 128) weight, already transposed to [in, out] (K, N), resident
    # b_ref : (1, 128)   bias, resident
    # o_ref : (tm, 128)  output tile
    #
    # bf16 operands -> single-pass MXU matmul (critical on v5e), f32 accumulate.
    x_bf = x_ref[...].astype(jnp.bfloat16)
    w_bf = wt_ref[...].astype(jnp.bfloat16)
    acc = jnp.dot(x_bf, w_bf, preferred_element_type=jnp.float32)
    o_ref[...] = (acc + b_ref[...].astype(jnp.float32)).astype(o_ref.dtype)


def _round_up(v, mult):
    return -(-v // mult) * mult


def _choose_tile_m(m, requested):
    """Row tile selection.

    Large M: use the requested (large) tile so per-step overhead is amortized;
    the resulting grid naturally has many steps for megacore splitting.
    Small M: a single grid step covering all rows (rounded to the 8-row
    sublane granularity) is latency-optimal on every generation — do not
    force an artificial 2-way split.
    """
    tm = max(8, (requested // 8) * 8)
    return min(tm, _round_up(m, 8))


def _vmem_limit_bytes(tm):
    """Scoped-VMEM budget using the *padded* on-chip layout of each tile."""
    k_lanes = _round_up(IN_FEATURES, 128)   # 300 -> 384 lanes for the x tile
    k_subl = _round_up(IN_FEATURES, 8)      # 300 -> 304 sublanes for the weight
    x_tile = tm * k_lanes * 4
    o_tile = tm * OUT_FEATURES * 4
    w_res = k_subl * OUT_FEATURES * 4
    b_res = 8 * OUT_FEATURES * 4
    # x / out are double-buffered by the pipeline; count weight/bias x2 too
    # (constant-index blocks still get the default buffer pair).
    budget = 2 * (x_tile + o_tile) + 2 * (w_res + b_res)
    # Headroom for compiler scratch, capped well under v7x's 64 MiB physical.
    return min(budget + (4 << 20), 48 << 20)


def embedding_forward(x, weight, bias, *, tile_m=4096):
    """Equivalent of Embedding.forward: x @ weight.T + bias.

    x:      [..., 300] float32 (or bfloat16)
    weight: [128, 300] float32 (PyTorch [out_features, in_features] layout)
    bias:   [128]      float32
    """
    orig_shape = x.shape
    assert orig_shape[-1] == IN_FEATURES
    x2d = x.reshape(-1, IN_FEATURES)
    m = x2d.shape[0]

    tm = _choose_tile_m(m, tile_m)
    grid_m = pl.cdiv(m, tm)

    # One-time host-side relayout of the tiny (150 KiB) weight: MXU-native
    # [K, N] RHS.  Bias reshaped to (1, 128) so it broadcasts over the tile.
    w_t = weight.T                      # [300, 128]
    b2d = bias.reshape(1, OUT_FEATURES)

    cost = pl.CostEstimate(
        flops=2 * m * IN_FEATURES * OUT_FEATURES,
        transcendentals=0,
        bytes_accessed=(x2d.dtype.itemsize * m * IN_FEATURES
                        + 4 * m * OUT_FEATURES
                        + 4 * IN_FEATURES * OUT_FEATURES
                        + 4 * OUT_FEATURES),
    )

    out = pl.pallas_call(
        _linear_kernel,
        out_shape=jax.ShapeDtypeStruct((m, OUT_FEATURES), x.dtype),
        grid_spec=pltpu.PrefetchScalarGridSpec(
            num_scalar_prefetch=0,
            grid=(grid_m,),
            in_specs=[
                pl.BlockSpec((tm, IN_FEATURES), lambda i: (i, 0)),
                # Constant block index -> weight/bias stay resident in VMEM
                # across grid steps (no repeated DMA).
                pl.BlockSpec((IN_FEATURES, OUT_FEATURES), lambda i: (0, 0)),
                pl.BlockSpec((1, OUT_FEATURES), lambda i: (0, 0)),
            ],
            out_specs=pl.BlockSpec((tm, OUT_FEATURES), lambda i: (i, 0)),
        ),
        compiler_params=pltpu.CompilerParams(
            dimension_semantics=("parallel",),
            vmem_limit_bytes=_vmem_limit_bytes(tm),
        ),
        cost_estimate=cost,
    )(x2d, w_t, b2d)

    return out.reshape(*orig_shape[:-1], OUT_FEATURES)


if __name__ == "__main__":
    key = jax.random.PRNGKey(0)
    k_w, k_b, k_x = jax.random.split(key, 3)

    # Deterministic parameter init mimicking nn.Linear default
    # (uniform in [-1/sqrt(fan_in), 1/sqrt(fan_in)]).
    bound = 1.0 / jnp.sqrt(jnp.float32(IN_FEATURES))
    weight = jax.random.uniform(
        k_w, (OUT_FEATURES, IN_FEATURES), dtype=jnp.float32,
        minval=-bound, maxval=bound,
    )
    bias = jax.random.uniform(
        k_b, (OUT_FEATURES,), dtype=jnp.float32,
        minval=-bound, maxval=bound,
    )

    # Small input consistent with the forward: [batch=2, seq=8, 300]
    x = jax.random.normal(k_x, (2, 8, IN_FEATURES), dtype=jnp.float32)

    y = embedding_forward(x, weight, bias)
    y = jax.block_until_ready(y)

    # Reference check in plain JAX (f32).  Tolerance accounts for the
    # intentional in-kernel bf16 operand rounding (f32 accumulation).
    y_ref = jnp.einsum("bsi,oi->bso", x, weight) + bias
    assert y.shape == (2, 8, OUT_FEATURES)
    assert jnp.allclose(y, y_ref, atol=2e-2, rtol=2e-2)

    print("KERNEL_OK")
</pallas_src>

<mosaic_0001>
module attributes {stable_mosaic.version = 11 : i64} {
  func.func @_linear_kernel(%arg0: i32, %arg1: memref<16x300xf32, #tpu.memory_space<vmem>>, %arg2: memref<300x128xf32, #tpu.memory_space<vmem>>, %arg3: memref<1x128xf32, #tpu.memory_space<vmem>>, %arg4: memref<16x128xf32, #tpu.memory_space<vmem>>) attributes {dimension_semantics = [#tpu.dimension_semantics<parallel>], iteration_bounds = array<i64: 1>, scalar_prefetch = 0 : i64, scratch_operands = 0 : i64, tpu.core_type = #tpu.core_type<tc>, window_params = [{transform_indices = @transform_0, window_bounds = array<i64: 16, 300>}, {pipeline_mode = #tpu.pipeline_mode<synchronous>, transform_indices = @transform_1, window_bounds = array<i64: 300, 128>}, {pipeline_mode = #tpu.pipeline_mode<synchronous>, transform_indices = @transform_2, window_bounds = array<i64: 1, 128>}, {transform_indices = @transform_3, window_bounds = array<i64: 16, 128>}]} {
    %c0 = arith.constant 0 : index
    %c0_0 = arith.constant 0 : index
    %0 = vector.load %arg1[%c0, %c0_0] : memref<16x300xf32, #tpu.memory_space<vmem>>, vector<16x300xf32>
    %1 = arith.truncf %0 : vector<16x300xf32> to vector<16x300xbf16>
    %c0_1 = arith.constant 0 : index
    %c0_2 = arith.constant 0 : index
    %2 = vector.load %arg2[%c0_1, %c0_2] : memref<300x128xf32, #tpu.memory_space<vmem>>, vector<300x128xf32>
    %3 = arith.truncf %2 : vector<300x128xf32> to vector<300x128xbf16>
    %cst = arith.constant dense<0.000000e+00> : vector<16x128xf32>
    %4 = tpu.matmul %1, %3, %cst {dimension_numbers = #tpu.dot_dimension_numbers<[1], [0], [0], [1], [0, 0, 1, 1], [], []>} : vector<16x300xbf16>, vector<300x128xbf16>, vector<16x128xf32> -> vector<16x128xf32>
    %c0_3 = arith.constant 0 : index
    %c0_4 = arith.constant 0 : index
    %5 = vector.load %arg3[%c0_3, %c0_4] : memref<1x128xf32, #tpu.memory_space<vmem>>, vector<1x128xf32>
    %6 = vector.broadcast %5 : vector<1x128xf32> to vector<16x128xf32>
    %7 = arith.addf %4, %6 : vector<16x128xf32>
    %c0_5 = arith.constant 0 : index
    %c0_6 = arith.constant 0 : index
    %8 = vector.load %arg4[%c0_5, %c0_6] : memref<16x128xf32, #tpu.memory_space<vmem>>, vector<16x128xf32>
    tpu.vector_store %arg4[%c0_5, %c0_6], %7 {strides = array<i32>} : memref<16x128xf32, #tpu.memory_space<vmem>>, vector<16x128xf32>,
    return
  }
  func.func @transform_0(%arg0: i32) -> (i32, i32) {
    %c0_i32 = arith.constant 0 : i32
    %c0_i32_0 = arith.constant 0 : i32
    return %arg0, %c0_i32 : i32, i32
  }
  func.func @transform_1(%arg0: i32) -> (i32, i32) {
    %c0_i32 = arith.constant 0 : i32
    %c0_i32_0 = arith.constant 0 : i32
    %c0_i32_1 = arith.constant 0 : i32
    return %c0_i32, %c0_i32_0 : i32, i32
  }
  func.func @transform_2(%arg0: i32) -> (i32, i32) {
    %c0_i32 = arith.constant 0 : i32
    %c0_i32_0 = arith.constant 0 : i32
    %c0_i32_1 = arith.constant 0 : i32
    return %c0_i32, %c0_i32_0 : i32, i32
  }
  func.func @transform_3(%arg0: i32) -> (i32, i32) {
    %c0_i32 = arith.constant 0 : i32
    %c0_i32_0 = arith.constant 0 : i32
    return %arg0, %c0_i32 : i32, i32
  }
}

</mosaic_0001>

<llo_original>
// kernel: tpu_custom_call.1
$region0: #{tpu_custom_call.1}
  #allocation0 [shape = 'u32[]', space=smem, size = 0x4, offset = 0x4, fixed_abs, tag = 'smem constant byte address 0x4 - core index']
  #allocation1 [shape = 'u32[144,128]{1,0:T(1,128)}', space=vmem, size = 0x12000, scoped, tag = 'internal scratch']
  %s0 = inlined_call_operand.hbm [shape: f32[16,300], index: 0, kind: input, shape index: {}]
  %s1 = inlined_call_operand.hbm [shape: f32[300,128], index: 1, kind: input, shape index: {}]
  %s2 = inlined_call_operand.vmem [shape: f32[1,128], index: 2, kind: input, shape index: {}]
  %s3 = inlined_call_operand.hbm [shape: f32[16,128], index: 3, kind: output, shape index: {}]
  %s4 = sld [smem:[#allocation0]]
  $region30: #{tpu_custom_call.1} parent=0
    _
  %s6 = ssub.s32 1, %s4
  %s7 = scalar_select 0, %s6, %s4
  $region1: #{tpu_custom_call.1} parent=0
    #allocation2 [shape = 'u8[24576]{0}', space=vmem, size = 0x6000, scoped, tag = 'input window, operand 0, single buffered']
    #allocation3 [shape = 's32[1]{0}', space=sflag, size = 0x4, scoped, tag = 'scoped memory for tpu_custom_call.1']
    #allocation4 [shape = 's32[1]{0}', space=sflag, size = 0x4, scoped, tag = 'scoped memory for tpu_custom_call.1']
    #allocation5 [shape = 'u8[155648]{0}', space=vmem, size = 0x26000, scoped, tag = 'input window, operand 1, single buffered']
    #allocation6 [shape = 's32[1]{0}', space=sflag, size = 0x4, scoped, tag = 'scoped memory for tpu_custom_call.1']
    #allocation7 [shape = 'u8[8192]{0}', space=vmem, size = 0x2000, scoped, tag = 'output window, operand 0, single buffered']
    %8 = vsyncpa [#allocation3], 0
    %9 = vsyncpa [#allocation6], 0
    %10 = vsyncpa [#allocation4], 0
    // Predicated region
    $region2: #{tpu_custom_call.1} parent=1 // pred_check
      _
    $region3: #{tpu_custom_call.1} parent=1 // pred_check_branch
      %12 = sbr.rel (0) target = $region5
    $region4: #{tpu_custom_call.1} parent=1 // pred_region
      %s14 = ssub.s32 768, 768
      %15 = vsyncadd [#allocation3], %s14
      %s16 = sshll.u32 [#allocation2], 4
      %s17 = int_to_ptr.vmem [resolvable:$true] %s16
      %22 = dma.hbm_to_vmem [thread:$0]  %s0, 768, %s17, [#allocation3], 384, 384, 24
    $region5: #{tpu_custom_call.1} parent=1 // pred_fallthru
      _
    // Predicated region
    $region6: #{tpu_custom_call.1} parent=1 // pred_check
      _
    $region7: #{tpu_custom_call.1} parent=1 // pred_check_branch
      %24 = sbr.rel (0) target = $region9
    $region8: #{tpu_custom_call.1} parent=1 // pred_region
      %s26 = ssub.s32 4864, 4864
      %27 = vsyncadd [#allocation6], %s26
      %s28 = sshll.u32 [#allocation5], 4
      %s29 = int_to_ptr.vmem [resolvable:$true] %s28
      %34 = dma.hbm_to_vmem [thread:$0]  %s1, 4864, %s29, [#allocation6], 128, 128, 8
    $region9: #{tpu_custom_call.1} parent=1 // pred_fallthru
      _
    // Predicated region
    $region10: #{tpu_custom_call.1} parent=1 // pred_check
      _
    $region11: #{tpu_custom_call.1} parent=1 // pred_check_branch
      %36 = sbr.rel (0) target = $region13
    $region12: #{tpu_custom_call.1} parent=1 // pred_region
      _
    $region13: #{tpu_custom_call.1} parent=1 // pred_fallthru
      _
    // Predicated region
    $region14: #{tpu_custom_call.1} parent=1 // pred_check
      _
    $region15: #{tpu_custom_call.1} parent=1 // pred_check_branch
      %38 = sbr.rel (0) target = $region17
    $region16: #{tpu_custom_call.1} parent=1 // pred_region
      %39 = dma.done [#allocation3], 768
    $region17: #{tpu_custom_call.1} parent=1 // pred_fallthru
      _
    // Predicated region
    $region18: #{tpu_custom_call.1} parent=1 // pred_check
      _
    $region19: #{tpu_custom_call.1} parent=1 // pred_check_branch
      %41 = sbr.rel (0) target = $region21
    $region20: #{tpu_custom_call.1} parent=1 // pred_region
      %42 = dma.done [#allocation6], 4864
    $region21: #{tpu_custom_call.1} parent=1 // pred_fallthru
      _
    %v44 = vld [vmem:[#allocation2] sm:$0xff]
    %v45 = vld [vmem:[#allocation2 + $0x8] sm:$0xff]
    %v46 = vld [vmem:[#allocation2 + $0x10] sm:$0xff]
    %v47 = vld [vmem:[#allocation2 + $0x18] sm:$0xff]
    %v48 = vld [vmem:[#allocation2 + $0x20] sm:$0xff]
    %v49 = vld [vmem:[#allocation2 + $0x28] sm:$0xff]
    %v50 = vpack.c.bf16 %v47, %v44
    %v51 = vpack.c.bf16 %v48, %v45
    %v52 = vpack.c.bf16 %v49, %v46
    %v53 = vld [vmem:[#allocation5] sm:$0xff]
    %v54 = vld [vmem:[#allocation5 + $0x8] sm:$0xff]
    %v55 = vld [vmem:[#allocation5 + $0x10] sm:$0xff]
    %v56 = vld [vmem:[#allocation5 + $0x18] sm:$0xff]
    %v57 = vld [vmem:[#allocation5 + $0x20] sm:$0xff]
    %v58 = vld [vmem:[#allocation5 + $0x28] sm:$0xff]
    %v59 = vld [vmem:[#allocation5 + $0x30] sm:$0xff]
    %v60 = vld [vmem:[#allocation5 + $0x38] sm:$0xff]
    %v61 = vld [vmem:[#allocation5 + $0x40] sm:$0xff]
    %v62 = vld [vmem:[#allocation5 + $0x48] sm:$0xff]
    %v63 = vld [vmem:[#allocation5 + $0x50] sm:$0xff]
    %v64 = vld [vmem:[#allocation5 + $0x58] sm:$0xff]
    %v65 = vld [vmem:[#allocation5 + $0x60] sm:$0xff]
    %v66 = vld [vmem:[#allocation5 + $0x68] sm:$0xff]
    %v67 = vld [vmem:[#allocation5 + $0x70] sm:$0xff]
    %v68 = vld [vmem:[#allocation5 + $0x78] sm:$0xff]
    %v69 = vld [vmem:[#allocation5 + $0x80] sm:$0xff]
    %v70 = vld [vmem:[#allocation5 + $0x88] sm:$0xff]
    %v71 = vld [vmem:[#allocation5 + $0x90] sm:$0xff]
    %v72 = vld [vmem:[#allocation5 + $0x98] sm:$0xff]
    %v73 = vld [vmem:[#allocation5 + $0xa0] sm:$0xff]
    %v74 = vld [vmem:[#allocation5 + $0xa8] sm:$0xff]
    %v75 = vld [vmem:[#allocation5 + $0xb0] sm:$0xff]
    %v76 = vld [vmem:[#allocation5 + $0xb8] sm:$0xff]
    %v77 = vld [vmem:[#allocation5 + $0xc0] sm:$0xff]
    %v78 = vld [vmem:[#allocation5 + $0xc8] sm:$0xff]
    %v79 = vld [vmem:[#allocation5 + $0xd0] sm:$0xff]
    %v80 = vld [vmem:[#allocation5 + $0xd8] sm:$0xff]
    %v81 = vld [vmem:[#allocation5 + $0xe0] sm:$0xff]
    %v82 = vld [vmem:[#allocation5 + $0xe8] sm:$0xff]
    %v83 = vld [vmem:[#allocation5 + $0xf0] sm:$0xff]
    %v84 = vld [vmem:[#allocation5 + $0xf8] sm:$0xff]
    %v85 = vld [vmem:[#allocation5 + $0x100] sm:$0xff]
    %v86 = vld [vmem:[#allocation5 + $0x108] sm:$0xff]
    %v87 = vld [vmem:[#allocation5 + $0x110] sm:$0xff]
    %v88 = vld [vmem:[#allocation5 + $0x118] sm:$0xff]
    %v89 = vld [vmem:[#allocation5 + $0x120] sm:$0xff]
    %v90 = vld [vmem:[#allocation5 + $0x128] sm:$0xf]
    %v91 = vpack.c.bf16 %v54, %v53
    %v92 = vpack.c.bf16 %v56, %v55
    %v93 = vpack.c.bf16 %v58, %v57
    %v94 = vpack.c.bf16 %v60, %v59
    %v95 = vpack.c.bf16 %v62, %v61
    %v96 = vpack.c.bf16 %v64, %v63
    %v97 = vpack.c.bf16 %v66, %v65
    %v98 = vpack.c.bf16 %v68, %v67
    %v99 = vpack.c.bf16 %v70, %v69
    %v100 = vpack.c.bf16 %v72, %v71
    %v101 = vpack.c.bf16 %v74, %v73
    %v102 = vpack.c.bf16 %v76, %v75
    %v103 = vpack.c.bf16 %v78, %v77
    %v104 = vpack.c.bf16 %v80, %v79
    %v105 = vpack.c.bf16 %v82, %v81
    %v106 = vpack.c.bf16 %v84, %v83
    %v107 = vpack.c.bf16 %v86, %v85
    %v108 = vpack.c.bf16 %v88, %v87
    %v109 = vpack.c.bf16 %v90, %v89
    %v110 = vld [vmem:[%s2] sm:$0x1]
    %v112 = vlaneseq
    %v113 = vshrl.u32 %v112, 7
    %v114 = vsub.s32 0, %v113
    %v115 = vrot.slane %v110, %v114
    %vm117 = vcmask 359424
    %v119 = vsel %vm117, %v52, 0
    %vm121 = vcmask 1045504
    %v123 = vsel %vm121, %v109, 0
    %125 = vmatprep.subr.bf16.mxu0 0
    %126 = vmatpush1.bf16.msra.mxu0 %v91
    %127 = vmatprep.subr.bf16.mxu0 0
    %128 = vmatpush1.bf16.msra.mxu0 %v92
    %129 = vmatprep.subr.bf16.mxu0 0
    %130 = vmatpush1.bf16.msra.mxu0 %v93
    %131 = vmatprep.subr.bf16.mxu0 0
    %132 = vmatpush1.bf16.msra.mxu0 %v94
    %133 = vmatprep.subr.bf16.mxu0 0
    %134 = vmatpush1.bf16.msra.mxu0 %v95
    %135 = vmatprep.subr.bf16.mxu0 0
    %136 = vmatpush1.bf16.msra.mxu0 %v96
    %137 = vmatprep.subr.bf16.mxu0 0
    %138 = vmatpush1.bf16.msra.mxu0 %v97
    %139 = vmatprep.subr.bf16.mxu0 0
    %140 = vmatpush1.bf16.msra.mxu0 %v98
    %141 = vmatprep.subr.bf16.mxu0 0
    %142 = vmatpush1.bf16.msra.mxu0 %v99
    %143 = vmatprep.subr.bf16.mxu0 0
    %144 = vmatpush1.bf16.msra.mxu0 %v100
    %145 = vmatprep.subr.bf16.mxu0 0
    %146 = vmatpush1.bf16.msra.mxu0 %v101
    %147 = vmatprep.subr.bf16.mxu0 0
    %148 = vmatpush1.bf16.msra.mxu0 %v102
    %149 = vmatprep.subr.bf16.mxu0 0
    %150 = vmatpush1.bf16.msra.mxu0 %v103
    %151 = vmatprep.subr.bf16.mxu0 0
    %152 = vmatpush1.bf16.msra.mxu0 %v104
    %153 = vmatprep.subr.bf16.mxu0 0
    %154 = vmatpush1.bf16.msra.mxu0 %v105
    %155 = vmatprep.subr.bf16.mxu0 0
    %156 = vmatpush1.bf16.msra.mxu0 %v106
    %157 = vmatprep.mubr.bf16.mxu0 %v51
    %158 = vmatmul.mubr.bf16.gmra.mrb[0].mxu0 %v50
    %v159 = vpop.f32.mrb[0].mxu0
    %v160 = vadd.f32 %v115, %v159
    %v161 = vpop.f32.mrb[0].mxu0
    %v162 = vpop.f32.mrb[0].mxu0
    %v163 = vadd.f32 %v115, %v162
    %v164 = vpop.f32.mrb[0].mxu0
    %165 = vdwg.mxu0
    %166 = vmatprep.subr.bf16.mxu0 0
    %167 = vmatpush1.bf16.msra.mxu0 %v107
    %168 = vmatprep.subr.bf16.mxu0 0
    %169 = vmatpush1.bf16.msra.mxu0 %v108
    %170 = vmatprep.subr.bf16.mxu0 0
    %171 = vmatpush1.bf16.msra.mxu0 %v123
    %172 = vmatprep.subr.bf16.mxu0 0
    %173 = vmatpush1.bf16.msra.mxu0 0
    %174 = vmatprep.subr.bf16.mxu0 0
    %175 = vmatpush1.bf16.msra.mxu0 0
    %176 = vmatprep.subr.bf16.mxu0 0
    %177 = vmatpush1.bf16.msra.mxu0 0
    %178 = vmatprep.subr.bf16.mxu0 0
    %179 = vmatpush1.bf16.msra.mxu0 0
    %180 = vmatprep.subr.bf16.mxu0 0
    %181 = vmatpush1.bf16.msra.mxu0 0
    %182 = vmatprep.subr.bf16.mxu0 0
    %183 = vmatpush1.bf16.msra.mxu0 0
    %184 = vmatprep.subr.bf16.mxu0 0
    %185 = vmatpush1.bf16.msra.mxu0 0
    %186 = vmatprep.subr.bf16.mxu0 0
    %187 = vmatpush1.bf16.msra.mxu0 0
    %188 = vmatprep.subr.bf16.mxu0 0
    %189 = vmatpush1.bf16.msra.mxu0 0
    %190 = vmatprep.subr.bf16.mxu0 0
    %191 = vmatpush1.bf16.msra.mxu0 0
    %192 = vmatprep.subr.bf16.mxu0 0
    %193 = vmatpush1.bf16.msra.mxu0 0
    %194 = vmatprep.subr.bf16.mxu0 0
    %195 = vmatpush1.bf16.msra.mxu0 0
    %196 = vmatprep.subr.bf16.mxu0 0
    %197 = vmatpush1.bf16.msra.mxu0 0
    %198 = vmatprep.mubr.bf16.mxu0 0
    %199 = vmatmul.mubr.bf16.gmra.mrb[0].mxu0 %v119
    %v200 = vpop.f32.mrb[0].mxu0
    %v201 = vadd.f32 %v160, %v200
    %v202 = vpop.f32.mrb[0].mxu0
    %v203 = vpop.f32.mrb[0].mxu0
    %v204 = vadd.f32 %v163, %v203
    %v205 = vpop.f32.mrb[0].mxu0
    %206 = vdwg.mxu0
    %207 = vst [vmem:[#allocation7] sm:$0xff] %v201
    %208 = vst [vmem:[#allocation7 + $0x8] sm:$0xff] %v204
    // Predicated region
    $region22: #{tpu_custom_call.1} parent=1 // pred_check
      _
    $region23: #{tpu_custom_call.1} parent=1 // pred_check_branch
      %210 = sbr.rel (0) target = $region25
    $region24: #{tpu_custom_call.1} parent=1 // pred_region
      %s212 = ssub.s32 256, 256
      %213 = vsyncadd [#allocation4], %s212
      %s214 = sshll.u32 [#allocation7], 4
      %s215 = int_to_ptr.vmem [resolvable:$true] %s214
      %220 = dma.vmem_to_hbm [thread:$0]  %s215, 256, %s3, [#allocation4], 128, 128, 8
    $region25: #{tpu_custom_call.1} parent=1 // pred_fallthru
      _
    // Predicated region
    $region26: #{tpu_custom_call.1} parent=1 // pred_check
      _
    $region27: #{tpu_custom_call.1} parent=1 // pred_check_branch
      %222 = sbr.rel (0) target = $region29
    $region28: #{tpu_custom_call.1} parent=1 // pred_region
      %223 = dma.done [#allocation4], 256
    $region29: #{tpu_custom_call.1} parent=1 // pred_fallthru
      _
    %224 = vsyncpa [#allocation3], 1
    %225 = vsyncpa [#allocation6], 1
    %226 = vsyncpa [#allocation4], 1

</llo_original>
